<compile_context>
chip_gen: v6e
topology: v6e:2x2x1
jax: 0.10.0
libtpu: 0.0.40
codegen_flags: <defaults>
</compile_context>

<pallas_src>
import functools
import math

import jax
import jax.numpy as jnp
from jax.experimental import pallas as pl
from jax.experimental.pallas import tpu as pltpu


_LOG2 = math.log(2.0)          # per-element loss of a zero-padded (0, 0) pair
_MAX_BLOCK_ELEMS = 1 << 20     # 4 MiB of f32 per input block
_MIN_BLOCK_ELEMS = 1 << 10     # one dense (8, 128) f32 vreg tile
_MAX_LANES = 2048              # lane width of a block


# ----------------------------------------------------------------------------
# Block selection: dense (tb, tn) with tb % 8 == 0, tn % 128 == 0.
# Grow the block while keeping ~4-8 grid steps (pipeline depth + v7x megacore
# balance) and <= 4 MiB per input block (2 inputs x 2 buffers = 16 MiB, under
# the explicit 32 MiB vmem limit on every generation).
# ----------------------------------------------------------------------------
def _choose_block(total):
    blk = _MIN_BLOCK_ELEMS
    while blk < _MAX_BLOCK_ELEMS and blk * 8 <= total:
        blk *= 2
    tn = min(blk // 8, _MAX_LANES)
    tb = blk // tn
    return tb, tn


# ----------------------------------------------------------------------------
# Pallas kernel: per-block joint-KL partial sum (target statically 0 or 1).
# ----------------------------------------------------------------------------
def _joint_kl_block_kernel(x0_ref, x1_ref, out_ref, *, target_is_one):
    x0 = jnp.clip(x0_ref[...].astype(jnp.float32), -10.0, 10.0)
    x1 = jnp.clip(x1_ref[...].astype(jnp.float32), -10.0, 10.0)
    e0 = jnp.exp(x0)
    e1 = jnp.exp(x1)

    # Fused logs: log(1+e0) + log(1+e1) - log(den) == log((1+e0)(1+e1)) - log(den)
    # 4 EUP ops/element (2 exp + 2 log).  Numerator <= ~4.9e8 thanks to the clip.
    num = (1.0 + e0) * (1.0 + e1)
    if target_is_one:
        den = 1.0 + e0 * e1     # t == 1  (t*log(t) term vanishes)
    else:
        den = e0 + e1           # t == 0  ((1-t)*log(1-t) term vanishes)
    loss = jnp.log(num) - jnp.log(den)

    # Full-block reduce: vreg-wise VPU adds + one small XLU reduce, hidden
    # behind the EUP work above.  One scalar partial per block -> SMEM.
    out_ref[0, 0] = jnp.sum(loss)


def joint_kl_loss_mean(in0, in1, *, target_is_one):
    """Mean joint-KL loss with a constant 0/1 target; hot path in Pallas."""
    assert in0.shape == in1.shape
    b, n = in0.shape
    total = b * n

    tb, tn = _choose_block(total)
    blk = tb * tn
    nb = -(-total // blk)               # cdiv
    pad = nb * blk - total

    def _prep(x):
        flat = x.reshape(-1)            # row-major flatten: free, no copy
        if pad:
            flat = jnp.pad(flat, (0, pad))   # zero tail -> loss(0,0) = log 2
        return flat.reshape(nb * tb, tn)

    kernel = functools.partial(_joint_kl_block_kernel,
                               target_is_one=target_is_one)

    partials = pl.pallas_call(
        kernel,
        out_shape=jax.ShapeDtypeStruct((nb, 1), jnp.float32),
        grid_spec=pltpu.PrefetchScalarGridSpec(
            num_scalar_prefetch=0,
            grid=(nb,),
            in_specs=[
                pl.BlockSpec((tb, tn), lambda i: (i, 0)),
                pl.BlockSpec((tb, tn), lambda i: (i, 0)),
            ],
            out_specs=pl.BlockSpec((1, 1), lambda i: (i, 0),
                                   memory_space=pltpu.MemorySpace.SMEM),
        ),
        compiler_params=pltpu.CompilerParams(
            dimension_semantics=("parallel",),
            vmem_limit_bytes=32 * 1024 * 1024),
    )(_prep(in0), _prep(in1))

    total_sum = jnp.sum(partials)
    if pad:
        # Remove the analytically known contribution of the zero padding.
        total_sum = total_sum - jnp.float32(pad * _LOG2)
    return total_sum / jnp.float32(total)


# ----------------------------------------------------------------------------
# Tiny box term (B x 64 elements): plain JAX (kernel launch would be overhead).
# ----------------------------------------------------------------------------
def _joint_kl_mean_t1_jax(x0, x1):
    x0 = jnp.clip(x0.astype(jnp.float32), -10.0, 10.0)
    x1 = jnp.clip(x1.astype(jnp.float32), -10.0, 10.0)
    e0, e1 = jnp.exp(x0), jnp.exp(x1)
    loss = jnp.log((1.0 + e0) * (1.0 + e1)) - jnp.log(1.0 + e0 * e1)
    return jnp.mean(loss)


# ----------------------------------------------------------------------------
# UShareLoss forward
# ----------------------------------------------------------------------------
@functools.partial(jax.jit, static_argnums=(2,))
def ushare_loss(outputs_non_manifold_all, ids_pts2pts, n_points,
                alpha_diff=1.0, alpha_same=1.0, alpha_box=1.0):
    x = outputs_non_manifold_all          # native dtype; kernel upcasts

    out_h0 = x[:, :n_points]
    out_h1 = x[:, n_points:2 * n_points]
    out_nm = x[:, 2 * n_points:]

    # loss_points_diff_sides: target = 0
    loss_diff = joint_kl_loss_mean(out_h0, out_h1, target_is_one=False)

    # loss_points_same_sides: target = 1 (gather along points axis)
    # TODO(synk): fuse this gather into the kernel (scalar-prefetched ids / DMA
    # gather) and fuse the t=0/t=1 passes into one pallas_call to cut HBM
    # traffic and launch overhead further; kept in the wrapper for robustness.
    out_space_corresp = jnp.take_along_axis(x, ids_pts2pts, axis=1)
    loss_same = joint_kl_loss_mean(out_nm, out_space_corresp,
                                   target_is_one=True)

    # box loss: outer-product pairing of the last 8 outputs, target = 1
    last8 = out_nm[:, -8:]
    outputs_box = jnp.repeat(last8, 8, axis=1)        # [b, i*8+j] = last8[b, i]
    outputs_box_corresp = jnp.tile(last8, (1, 8))     # [b, i*8+j] = last8[b, j]
    loss_box = _joint_kl_mean_t1_jax(outputs_box, outputs_box_corresp)

    return (alpha_diff * loss_diff
            + alpha_same * loss_same
            + alpha_box * loss_box)


# ----------------------------------------------------------------------------
# Pure JAX reference (mirrors the PyTorch spec) for in-script sanity checks
# ----------------------------------------------------------------------------
def _joint_kl_ref(in0, in1, target):
    x0 = jnp.clip(in0.astype(jnp.float32), -10.0, 10.0)
    x1 = jnp.clip(in1.astype(jnp.float32), -10.0, 10.0)
    e0, e1 = jnp.exp(x0), jnp.exp(x1)
    t = target
    loss = jnp.log(1.0 + e0) + jnp.log(1.0 + e1)
    m0 = t > 1e-7
    safe_t = jnp.where(m0, t, 1.0)
    loss = loss + jnp.where(m0, -t * jnp.log(1.0 + e0 * e1) + t * jnp.log(safe_t), 0.0)
    omt = 1.0 - t
    m1 = omt > 1e-7
    safe_omt = jnp.where(m1, omt, 1.0)
    loss = loss + jnp.where(m1, -omt * jnp.log(e0 + e1) + omt * jnp.log(safe_omt), 0.0)
    return jnp.mean(loss)


def _ushare_loss_ref(x, ids, n_points):
    h0, h1, nm = x[:, :n_points], x[:, n_points:2 * n_points], x[:, 2 * n_points:]
    l_diff = _joint_kl_ref(h0, h1, jnp.zeros_like(h0))
    corresp = jnp.take_along_axis(x, ids, axis=1)
    l_same = _joint_kl_ref(nm, corresp, jnp.ones_like(nm))
    last8 = nm[:, -8:]
    box = jnp.repeat(last8, 8, axis=1)
    box_c = jnp.tile(last8, (1, 8))
    l_box = _joint_kl_ref(box, box_c, jnp.ones_like(box))
    return l_diff + l_same + l_box


# ----------------------------------------------------------------------------
if __name__ == "__main__":
    key = jax.random.PRNGKey(0)

    # --- Case 1: small shapes (single-block grid, heavy pad correction) ----
    B = 2
    n_points = 8
    n_rest = 16                        # must be >= 8 (box uses last 8 outputs)
    M = 2 * n_points + n_rest          # total points per batch = 32

    k1, k2, k3, k4 = jax.random.split(key, 4)
    outputs_all = jax.random.normal(k1, (B, M), dtype=jnp.float32) * 3.0
    ids_pts2pts = jax.random.randint(k2, (B, n_rest), 0, M, dtype=jnp.int32)

    loss = jax.block_until_ready(ushare_loss(outputs_all, ids_pts2pts, n_points))
    loss_ref = _ushare_loss_ref(outputs_all, ids_pts2pts, n_points)
    assert jnp.isfinite(loss), "loss is not finite (case 1)"
    assert jnp.allclose(loss, loss_ref, rtol=1e-4, atol=1e-4), (
        f"case1 mismatch: pallas={loss} ref={loss_ref}")

    # --- Case 2: larger shapes (multi-block parallel grid, dense reshape) --
    B2 = 4
    n_points2 = 64
    n_rest2 = 20000
    M2 = 2 * n_points2 + n_rest2

    outputs_all2 = jax.random.normal(k3, (B2, M2), dtype=jnp.float32) * 3.0
    ids2 = jax.random.randint(k4, (B2, n_rest2), 0, M2, dtype=jnp.int32)

    loss2 = jax.block_until_ready(ushare_loss(outputs_all2, ids2, n_points2))
    loss2_ref = _ushare_loss_ref(outputs_all2, ids2, n_points2)
    assert jnp.isfinite(loss2), "loss is not finite (case 2)"
    assert jnp.allclose(loss2, loss2_ref, rtol=1e-4, atol=1e-4), (
        f"case2 mismatch: pallas={loss2} ref={loss2_ref}")

    print("KERNEL_OK")
</pallas_src>

<mosaic_0001>
module attributes {stable_mosaic.version = 11 : i64} {
  func.func @_joint_kl_block_kernel(%arg0: i32, %arg1: memref<8x128xf32, #tpu.memory_space<vmem>>, %arg2: memref<8x128xf32, #tpu.memory_space<vmem>>, %arg3: memref<1x1xf32, #tpu.memory_space<smem>>) attributes {dimension_semantics = [#tpu.dimension_semantics<parallel>], iteration_bounds = array<i64: 1>, scalar_prefetch = 0 : i64, scratch_operands = 0 : i64, tpu.core_type = #tpu.core_type<tc>, window_params = [{transform_indices = @transform_0, window_bounds = array<i64: 8, 128>}, {transform_indices = @transform_1, window_bounds = array<i64: 8, 128>}, {transform_indices = @transform_2, window_bounds = array<i64: 1, 1>}]} {
    %c0 = arith.constant 0 : index
    %c0_0 = arith.constant 0 : index
    %0 = vector.load %arg1[%c0, %c0_0] : memref<8x128xf32, #tpu.memory_space<vmem>>, vector<8x128xf32>
    %cst = arith.constant -1.000000e+01 : f32
    %cst_1 = arith.constant 1.000000e+01 : f32
    %1 = vector.broadcast %cst : f32 to vector<8x128xf32>
    %2 = arith.maximumf %1, %0 : vector<8x128xf32>
    %3 = vector.broadcast %cst_1 : f32 to vector<8x128xf32>
    %4 = arith.minimumf %3, %2 : vector<8x128xf32>
    %c0_2 = arith.constant 0 : index
    %c0_3 = arith.constant 0 : index
    %5 = vector.load %arg2[%c0_2, %c0_3] : memref<8x128xf32, #tpu.memory_space<vmem>>, vector<8x128xf32>
    %cst_4 = arith.constant -1.000000e+01 : f32
    %cst_5 = arith.constant 1.000000e+01 : f32
    %6 = vector.broadcast %cst_4 : f32 to vector<8x128xf32>
    %7 = arith.maximumf %6, %5 : vector<8x128xf32>
    %8 = vector.broadcast %cst_5 : f32 to vector<8x128xf32>
    %9 = arith.minimumf %8, %7 : vector<8x128xf32>
    %10 = math.exp %4 : vector<8x128xf32>
    %11 = math.exp %9 : vector<8x128xf32>
    %cst_6 = arith.constant 1.000000e+00 : f32
    %12 = vector.broadcast %cst_6 : f32 to vector<8x128xf32>
    %13 = arith.addf %12, %10 : vector<8x128xf32>
    %cst_7 = arith.constant 1.000000e+00 : f32
    %14 = vector.broadcast %cst_7 : f32 to vector<8x128xf32>
    %15 = arith.addf %14, %11 : vector<8x128xf32>
    %16 = arith.mulf %13, %15 : vector<8x128xf32>
    %17 = arith.addf %10, %11 : vector<8x128xf32>
    %18 = math.log %16 : vector<8x128xf32>
    %19 = math.log %17 : vector<8x128xf32>
    %20 = arith.subf %18, %19 : vector<8x128xf32>
    %21 = vector.shape_cast %20 : vector<8x128xf32> to vector<1x8x128xf32>
    %cst_8 = arith.constant dense<0.000000e+00> : vector<1xf32>
    %22 = vector.multi_reduction <add>, %21, %cst_8 [1, 2] : vector<1x8x128xf32> to vector<1xf32>
    %23 = vector.shape_cast %22 : vector<1xf32> to vector<1x1x1xf32>
    %24 = vector.extract %23[0, 0, 0] : f32 from vector<1x1x1xf32>
    %c0_9 = arith.constant 0 : index
    %c0_10 = arith.constant 0 : index
    %25 = memref.load %arg3[%c0_9, %c0_10] : memref<1x1xf32, #tpu.memory_space<smem>>
    memref.store %24, %arg3[%c0_9, %c0_10] : memref<1x1xf32, #tpu.memory_space<smem>>
    return
  }
  func.func @transform_0(%arg0: i32) -> (i32, i32) {
    %c0_i32 = arith.constant 0 : i32
    %c0_i32_0 = arith.constant 0 : i32
    return %arg0, %c0_i32 : i32, i32
  }
  func.func @transform_1(%arg0: i32) -> (i32, i32) {
    %c0_i32 = arith.constant 0 : i32
    %c0_i32_0 = arith.constant 0 : i32
    return %arg0, %c0_i32 : i32, i32
  }
  func.func @transform_2(%arg0: i32) -> (i32, i32) {
    %c0_i32 = arith.constant 0 : i32
    %c0_i32_0 = arith.constant 0 : i32
    return %arg0, %c0_i32 : i32, i32
  }
}

module attributes {stable_mosaic.version = 11 : i64} {
  func.func @_joint_kl_block_kernel(%arg0: i32, %arg1: memref<8x128xf32, #tpu.memory_space<vmem>>, %arg2: memref<8x128xf32, #tpu.memory_space<vmem>>, %arg3: memref<1x1xf32, #tpu.memory_space<smem>>) attributes {dimension_semantics = [#tpu.dimension_semantics<parallel>], iteration_bounds = array<i64: 1>, scalar_prefetch = 0 : i64, scratch_operands = 0 : i64, tpu.core_type = #tpu.core_type<tc>, window_params = [{transform_indices = @transform_0, window_bounds = array<i64: 8, 128>}, {transform_indices = @transform_1, window_bounds = array<i64: 8, 128>}, {transform_indices = @transform_2, window_bounds = array<i64: 1, 1>}]} {
    %c0 = arith.constant 0 : index
    %c0_0 = arith.constant 0 : index
    %0 = vector.load %arg1[%c0, %c0_0] : memref<8x128xf32, #tpu.memory_space<vmem>>, vector<8x128xf32>
    %cst = arith.constant -1.000000e+01 : f32
    %cst_1 = arith.constant 1.000000e+01 : f32
    %1 = vector.broadcast %cst : f32 to vector<8x128xf32>
    %2 = arith.maximumf %1, %0 : vector<8x128xf32>
    %3 = vector.broadcast %cst_1 : f32 to vector<8x128xf32>
    %4 = arith.minimumf %3, %2 : vector<8x128xf32>
    %c0_2 = arith.constant 0 : index
    %c0_3 = arith.constant 0 : index
    %5 = vector.load %arg2[%c0_2, %c0_3] : memref<8x128xf32, #tpu.memory_space<vmem>>, vector<8x128xf32>
    %cst_4 = arith.constant -1.000000e+01 : f32
    %cst_5 = arith.constant 1.000000e+01 : f32
    %6 = vector.broadcast %cst_4 : f32 to vector<8x128xf32>
    %7 = arith.maximumf %6, %5 : vector<8x128xf32>
    %8 = vector.broadcast %cst_5 : f32 to vector<8x128xf32>
    %9 = arith.minimumf %8, %7 : vector<8x128xf32>
    %10 = math.exp %4 : vector<8x128xf32>
    %11 = math.exp %9 : vector<8x128xf32>
    %cst_6 = arith.constant 1.000000e+00 : f32
    %12 = vector.broadcast %cst_6 : f32 to vector<8x128xf32>
    %13 = arith.addf %12, %10 : vector<8x128xf32>
    %cst_7 = arith.constant 1.000000e+00 : f32
    %14 = vector.broadcast %cst_7 : f32 to vector<8x128xf32>
    %15 = arith.addf %14, %11 : vector<8x128xf32>
    %16 = arith.mulf %13, %15 : vector<8x128xf32>
    %17 = arith.mulf %10, %11 : vector<8x128xf32>
    %cst_8 = arith.constant 1.000000e+00 : f32
    %18 = vector.broadcast %cst_8 : f32 to vector<8x128xf32>
    %19 = arith.addf %18, %17 : vector<8x128xf32>
    %20 = math.log %16 : vector<8x128xf32>
    %21 = math.log %19 : vector<8x128xf32>
    %22 = arith.subf %20, %21 : vector<8x128xf32>
    %23 = vector.shape_cast %22 : vector<8x128xf32> to vector<1x8x128xf32>
    %cst_9 = arith.constant dense<0.000000e+00> : vector<1xf32>
    %24 = vector.multi_reduction <add>, %23, %cst_9 [1, 2] : vector<1x8x128xf32> to vector<1xf32>
    %25 = vector.shape_cast %24 : vector<1xf32> to vector<1x1x1xf32>
    %26 = vector.extract %25[0, 0, 0] : f32 from vector<1x1x1xf32>
    %c0_10 = arith.constant 0 : index
    %c0_11 = arith.constant 0 : index
    %27 = memref.load %arg3[%c0_10, %c0_11] : memref<1x1xf32, #tpu.memory_space<smem>>
    memref.store %26, %arg3[%c0_10, %c0_11] : memref<1x1xf32, #tpu.memory_space<smem>>
    return
  }
  func.func @transform_0(%arg0: i32) -> (i32, i32) {
    %c0_i32 = arith.constant 0 : i32
    %c0_i32_0 = arith.constant 0 : i32
    return %arg0, %c0_i32 : i32, i32
  }
  func.func @transform_1(%arg0: i32) -> (i32, i32) {
    %c0_i32 = arith.constant 0 : i32
    %c0_i32_0 = arith.constant 0 : i32
    return %arg0, %c0_i32 : i32, i32
  }
  func.func @transform_2(%arg0: i32) -> (i32, i32) {
    %c0_i32 = arith.constant 0 : i32
    %c0_i32_0 = arith.constant 0 : i32
    return %arg0, %c0_i32 : i32, i32
  }
}

</mosaic_0001>

<llo_original>
// kernel: ushare_loss.3
$region0: #{ushare_loss.3}
  #allocation0 [shape = 'u32[]', space=smem, size = 0x4, offset = 0x4, fixed_abs, tag = 'smem constant byte address 0x4 - core index']
  #allocation1 [shape = 'u32[144,128]{1,0:T(1,128)}', space=vmem, size = 0x12000, scoped, tag = 'internal scratch']
  %s0 = inlined_call_operand.vmem [shape: f32[8,128], index: 0, kind: input, shape index: {}]
  %s1 = inlined_call_operand.vmem [shape: f32[8,128], index: 1, kind: input, shape index: {}]
  %s2 = inlined_call_operand.hbm [shape: f32[1,1], index: 2, kind: output, shape index: {}]
  %s3 = sld [smem:[#allocation0]]
  $region18: #{ushare_loss.3} parent=0
    _
  %s5 = ssub.s32 1, %s3
  %s6 = scalar_select 0, %s5, %s3
  $region1: #{ushare_loss.3} parent=0
    #allocation2 [shape = 'u8[512]{0}', space=smem, size = 0x200, scoped, tag = 'output window, operand 0, single buffered']
    #allocation3 [shape = 's32[1]{0}', space=sflag, size = 0x4, scoped, tag = 'scoped memory for ushare_loss.3']
    %7 = vsyncpa [#allocation3], 0
    // Predicated region
    $region2: #{ushare_loss.3} parent=1 // pred_check
      _
    $region3: #{ushare_loss.3} parent=1 // pred_check_branch
      %9 = sbr.rel (0) target = $region5
    $region4: #{ushare_loss.3} parent=1 // pred_region
      _
    $region5: #{ushare_loss.3} parent=1 // pred_fallthru
      _
    // Predicated region
    $region6: #{ushare_loss.3} parent=1 // pred_check
      _
    $region7: #{ushare_loss.3} parent=1 // pred_check_branch
      %11 = sbr.rel (0) target = $region9
    $region8: #{ushare_loss.3} parent=1 // pred_region
      _
    $region9: #{ushare_loss.3} parent=1 // pred_fallthru
      _
    %v12 = vld [vmem:[%s0] sm:$0xff]
    %v13 = vmax.f32 %v12, -10.0
    %v14 = vmin.f32 %v13, 10.0
    %v15 = vld [vmem:[%s1] sm:$0xff]
    %v16 = vmax.f32 %v15, -10.0
    %v17 = vmin.f32 %v16, 10.0
    %v18 = vmul.f32 %v14, 1.442695
    %v19 = vpow.pop %v18
    %v20 = vmul.f32 %v17, 1.442695
    %v21 = vpow.pop %v20
    %v22 = vadd.f32 %v19, 1.0
    %v23 = vadd.f32 %v21, 1.0
    %v24 = vmul.f32 %v22, %v23
    %v25 = vmul.f32 %v19, %v21
    %v26 = vadd.f32 %v25, 1.0
    %v27 = vlog2.pop %v24
    %v28 = vmul.f32 %v27, 0.6931472
    %v29 = vlog2.pop %v26
    %v30 = vmul.f32 %v29, 0.6931472
    %v31 = vsub.f32 %v28, %v30
    %32 = vadd.xlane.f32.xlu0 %v31
    %v33 = vpop.xlane.xlu0 %32
    %v34 = vrot.slane %v33, 4
    %v35 = vadd.f32 %v33, %v34
    %v36 = vrot.slane %v35, 2
    %v37 = vadd.f32 %v35, %v36
    %v38 = vrot.slane %v37, 1
    %v39 = vadd.f32 %v37, %v38
    %s40 = vtos %v39
    %s41 = scalar_lea.smem [#allocation2], 0
    %42 = sst [smem:[%s41]] %s40
    // Predicated region
    $region10: #{ushare_loss.3} parent=1 // pred_check
      _
    $region11: #{ushare_loss.3} parent=1 // pred_check_branch
      %44 = sbr.rel (0) target = $region13
    $region12: #{ushare_loss.3} parent=1 // pred_region
      %s46 = ssub.s32 16, 16
      %47 = vsyncadd [#allocation3], %s46
      %50 = dma.smem_to_hbm [#allocation2], 16, %s2, [#allocation3]
    $region13: #{ushare_loss.3} parent=1 // pred_fallthru
      _
    // Predicated region
    $region14: #{ushare_loss.3} parent=1 // pred_check
      _
    $region15: #{ushare_loss.3} parent=1 // pred_check_branch
      %52 = sbr.rel (0) target = $region17
    $region16: #{ushare_loss.3} parent=1 // pred_region
      %53 = dma.done [#allocation3], 16
    $region17: #{ushare_loss.3} parent=1 // pred_fallthru
      _
    %54 = sfence
    %55 = vsyncpa [#allocation3], 1

// kernel: ushare_loss.2
$region0: #{ushare_loss.2}
  #allocation0 [shape = 'u32[]', space=smem, size = 0x4, offset = 0x4, fixed_abs, tag = 'smem constant byte address 0x4 - core index']
  #allocation1 [shape = 'u32[144,128]{1,0:T(1,128)}', space=vmem, size = 0x12000, scoped, tag = 'internal scratch']
  %s0 = inlined_call_operand.vmem [shape: f32[8,128], index: 0, kind: input, shape index: {}]
  %s1 = inlined_call_operand.vmem [shape: f32[8,128], index: 1, kind: input, shape index: {}]
  %s2 = inlined_call_operand.hbm [shape: f32[1,1], index: 2, kind: output, shape index: {}]
  %s3 = sld [smem:[#allocation0]]
  $region18: #{ushare_loss.2} parent=0
    _
  %s5 = ssub.s32 1, %s3
  %s6 = scalar_select 0, %s5, %s3
  $region1: #{ushare_loss.2} parent=0
    #allocation2 [shape = 'u8[512]{0}', space=smem, size = 0x200, scoped, tag = 'output window, operand 0, single buffered']
    #allocation3 [shape = 's32[1]{0}', space=sflag, size = 0x4, scoped, tag = 'scoped memory for ushare_loss.2']
    %7 = vsyncpa [#allocation3], 0
    // Predicated region
    $region2: #{ushare_loss.2} parent=1 // pred_check
      _
    $region3: #{ushare_loss.2} parent=1 // pred_check_branch
      %9 = sbr.rel (0) target = $region5
    $region4: #{ushare_loss.2} parent=1 // pred_region
      _
    $region5: #{ushare_loss.2} parent=1 // pred_fallthru
      _
    // Predicated region
    $region6: #{ushare_loss.2} parent=1 // pred_check
      _
    $region7: #{ushare_loss.2} parent=1 // pred_check_branch
      %11 = sbr.rel (0) target = $region9
    $region8: #{ushare_loss.2} parent=1 // pred_region
      _
    $region9: #{ushare_loss.2} parent=1 // pred_fallthru
      _
    %v12 = vld [vmem:[%s0] sm:$0xff]
    %v13 = vmax.f32 %v12, -10.0
    %v14 = vmin.f32 %v13, 10.0
    %v15 = vld [vmem:[%s1] sm:$0xff]
    %v16 = vmax.f32 %v15, -10.0
    %v17 = vmin.f32 %v16, 10.0
    %v18 = vmul.f32 %v14, 1.442695
    %v19 = vpow.pop %v18
    %v20 = vmul.f32 %v17, 1.442695
    %v21 = vpow.pop %v20
    %v22 = vadd.f32 %v19, 1.0
    %v23 = vadd.f32 %v21, 1.0
    %v24 = vmul.f32 %v22, %v23
    %v25 = vadd.f32 %v19, %v21
    %v26 = vlog2.pop %v24
    %v27 = vmul.f32 %v26, 0.6931472
    %v28 = vlog2.pop %v25
    %v29 = vmul.f32 %v28, 0.6931472
    %v30 = vsub.f32 %v27, %v29
    %31 = vadd.xlane.f32.xlu0 %v30
    %v32 = vpop.xlane.xlu0 %31
    %v33 = vrot.slane %v32, 4
    %v34 = vadd.f32 %v32, %v33
    %v35 = vrot.slane %v34, 2
    %v36 = vadd.f32 %v34, %v35
    %v37 = vrot.slane %v36, 1
    %v38 = vadd.f32 %v36, %v37
    %s39 = vtos %v38
    %s40 = scalar_lea.smem [#allocation2], 0
    %41 = sst [smem:[%s40]] %s39
    // Predicated region
    $region10: #{ushare_loss.2} parent=1 // pred_check
      _
    $region11: #{ushare_loss.2} parent=1 // pred_check_branch
      %43 = sbr.rel (0) target = $region13
    $region12: #{ushare_loss.2} parent=1 // pred_region
      %s45 = ssub.s32 16, 16
      %46 = vsyncadd [#allocation3], %s45
      %49 = dma.smem_to_hbm [#allocation2], 16, %s2, [#allocation3]
    $region13: #{ushare_loss.2} parent=1 // pred_fallthru
      _
    // Predicated region
    $region14: #{ushare_loss.2} parent=1 // pred_check
      _
    $region15: #{ushare_loss.2} parent=1 // pred_check_branch
      %51 = sbr.rel (0) target = $region17
    $region16: #{ushare_loss.2} parent=1 // pred_region
      %52 = dma.done [#allocation3], 16
    $region17: #{ushare_loss.2} parent=1 // pred_fallthru
      _
    %53 = sfence
    %54 = vsyncpa [#allocation3], 1

</llo_original>
